<compile_context>
chip_gen: v7x
topology: tpu7x:2x2x1
jax: 0.10.0
libtpu: 0.0.40
codegen_flags: <defaults>
</compile_context>

<pallas_src>
import functools
import math

import jax
import jax.numpy as jnp
from jax.experimental import pallas as pl
from jax.experimental.pallas import tpu as pltpu


def _round_up(x: int, m: int) -> int:
    return pl.cdiv(x, m) * m


def _embed_gather_kernel(ids_ref, table_ref, out_ref, buf_ref, sem_ref, *, tile_n):
    """Gather `tile_n` embedding rows for grid step i.

    ids_ref:   (N_pad,)     int32, SMEM (scalar-prefetched, flattened token ids)
    table_ref: (V, E)       HBM ref (memory_space=pl.ANY); DMA source only
    out_ref:   (tile_n, E)  VMEM output block
    buf_ref:   (tile_n, E)  VMEM scratch that the row DMAs land in
    sem_ref:   (1,)         DMA semaphore shared by all row copies of this step
    """
    base = pl.program_id(0) * tile_n

    # Issue all row gathers up front so the DMAs run concurrently.
    copies = []
    for r in range(tile_n):  # tile_n is static -> unrolled at trace time
        tok = ids_ref[base + r]
        cp = pltpu.make_async_copy(
            table_ref.at[pl.ds(tok, 1)],   # (1, E) row of the HBM table
            buf_ref.at[pl.ds(r, 1)],       # (1, E) row of the VMEM buffer
            sem_ref.at[0],
        )
        cp.start()
        copies.append(cp)

    # Drain: all copies share one semaphore and have equal size, so after
    # these waits every gathered row has landed in buf_ref.
    for cp in copies:
        cp.wait()

    # Lane-dense store of the gathered block into the pipelined output.
    out_ref[...] = buf_ref[...]


def token_embedding(ids, table, *, tile_n=128):
    """Pallas equivalent of TokenEmbedding.forward: table[ids]."""
    V, E = table.shape
    lead_shape = ids.shape
    N = math.prod(lead_shape)

    ids_flat = ids.reshape(N).astype(jnp.int32)

    # Clamp the token tile for tiny inputs and keep it sublane-aligned (x8).
    tile_n = min(int(tile_n), _round_up(N, 8))
    tile_n = max(8, _round_up(tile_n, 8))
    n_pad = _round_up(N, tile_n)
    if n_pad != N:
        # Pad with id 0 (always a valid row); padded rows are sliced off below.
        ids_flat = jnp.pad(ids_flat, (0, n_pad - N))

    grid = (n_pad // tile_n,)

    out_flat = pl.pallas_call(
        functools.partial(_embed_gather_kernel, tile_n=tile_n),
        out_shape=jax.ShapeDtypeStruct((n_pad, E), table.dtype),
        grid_spec=pltpu.PrefetchScalarGridSpec(
            num_scalar_prefetch=1,                          # ids -> SMEM
            grid=grid,
            in_specs=[pl.BlockSpec(memory_space=pl.ANY)],   # table stays in HBM
            out_specs=pl.BlockSpec((tile_n, E), lambda i, ids_ref: (i, 0)),
            scratch_shapes=[
                pltpu.VMEM((tile_n, E), table.dtype),
                pltpu.SemaphoreType.DMA((1,)),
            ],
        ),
        compiler_params=pltpu.CompilerParams(
            dimension_semantics=("parallel",),              # shard tokens over TCs
        ),
    )(ids_flat, table)

    return out_flat[:N].reshape(*lead_shape, E)


if __name__ == "__main__":
    vocab_size = 512
    embed_size = 128          # multiple of 128 -> lane-dense output stores
    batch, seq = 2, 8

    key = jax.random.PRNGKey(0)
    k_table, k_ids = jax.random.split(key)

    # Deterministic parameter init (nn.Embedding weight ~ N(0, 1)).
    table = jax.random.normal(k_table, (vocab_size, embed_size), dtype=jnp.float32)
    ids = jax.random.randint(k_ids, (batch, seq), 0, vocab_size, dtype=jnp.int32)

    out = jax.block_until_ready(token_embedding(ids, table))

    # Reference check against a plain JAX gather.
    ref = jnp.take(table, ids, axis=0)
    assert out.shape == (batch, seq, embed_size)
    assert out.dtype == table.dtype
    assert jnp.allclose(out, ref), "mismatch vs reference gather"

    print("KERNEL_OK")
</pallas_src>

<mosaic_0001>
module attributes {stable_mosaic.version = 11 : i64} {
  func.func @_embed_gather_kernel(%arg0: i32, %arg1: memref<16xi32, #tpu.memory_space<smem>>, %arg2: memref<512x128xf32, #tpu.memory_space<any>>, %arg3: memref<16x128xf32, #tpu.memory_space<vmem>>, %arg4: memref<16x128xf32, #tpu.memory_space<vmem>>, %arg5: memref<1x!tpu.dma_semaphore, #tpu.memory_space<semaphore_mem>>) attributes {dimension_semantics = [#tpu.dimension_semantics<parallel>], iteration_bounds = array<i64: 1>, scalar_prefetch = 1 : i64, scratch_operands = 2 : i64, tpu.core_type = #tpu.core_type<tc>, window_params = [{}, {transform_indices = @transform_1, window_bounds = array<i64: 16, 128>}]} {
    %c16_i32 = arith.constant 16 : i32
    %0 = arith.muli %arg0, %c16_i32 : i32
    %c0_i32 = arith.constant 0 : i32
    %1 = arith.addi %0, %c0_i32 : i32
    %2 = arith.index_cast %1 : i32 to index
    %3 = memref.load %arg1[%2] : memref<16xi32, #tpu.memory_space<smem>>
    %c0_i32_0 = arith.constant 0 : i32
    %c0_i32_1 = arith.constant 0 : i32
    %4 = tpu.memref_slice %arg2[%3, %c0_i32_1] : memref<512x128xf32, #tpu.memory_space<any>> -> memref<1x128xf32, #tpu.memory_space<any>>
    %c0_i32_2 = arith.constant 0 : i32
    %c0_i32_3 = arith.constant 0 : i32
    %5 = tpu.memref_slice %arg4[%c0_i32_2, %c0_i32_3] : memref<16x128xf32, #tpu.memory_space<vmem>> -> memref<1x128xf32, #tpu.memory_space<vmem>>
    %6 = tpu.memref_slice %arg5[%c0_i32_0] : memref<1x!tpu.dma_semaphore, #tpu.memory_space<semaphore_mem>> -> memref<1x!tpu.dma_semaphore, #tpu.memory_space<semaphore_mem>>
    %7 = tpu.memref_squeeze %6 : memref<1x!tpu.dma_semaphore, #tpu.memory_space<semaphore_mem>> -> memref<!tpu.dma_semaphore, #tpu.memory_space<semaphore_mem>>
    tpu.enqueue_dma source(%4 : memref<1x128xf32, #tpu.memory_space<any>>) target(%5 : memref<1x128xf32, #tpu.memory_space<vmem>>) target_semaphore(%7 : memref<!tpu.dma_semaphore, #tpu.memory_space<semaphore_mem>>)
    %c1_i32 = arith.constant 1 : i32
    %8 = arith.addi %0, %c1_i32 : i32
    %9 = arith.index_cast %8 : i32 to index
    %10 = memref.load %arg1[%9] : memref<16xi32, #tpu.memory_space<smem>>
    %c0_i32_4 = arith.constant 0 : i32
    %c0_i32_5 = arith.constant 0 : i32
    %11 = tpu.memref_slice %arg2[%10, %c0_i32_5] : memref<512x128xf32, #tpu.memory_space<any>> -> memref<1x128xf32, #tpu.memory_space<any>>
    %c1_i32_6 = arith.constant 1 : i32
    %c0_i32_7 = arith.constant 0 : i32
    %12 = tpu.memref_slice %arg4[%c1_i32_6, %c0_i32_7] : memref<16x128xf32, #tpu.memory_space<vmem>> -> memref<1x128xf32, #tpu.memory_space<vmem>>
    %13 = tpu.memref_slice %arg5[%c0_i32_4] : memref<1x!tpu.dma_semaphore, #tpu.memory_space<semaphore_mem>> -> memref<1x!tpu.dma_semaphore, #tpu.memory_space<semaphore_mem>>
    %14 = tpu.memref_squeeze %13 : memref<1x!tpu.dma_semaphore, #tpu.memory_space<semaphore_mem>> -> memref<!tpu.dma_semaphore, #tpu.memory_space<semaphore_mem>>
    tpu.enqueue_dma source(%11 : memref<1x128xf32, #tpu.memory_space<any>>) target(%12 : memref<1x128xf32, #tpu.memory_space<vmem>>) target_semaphore(%14 : memref<!tpu.dma_semaphore, #tpu.memory_space<semaphore_mem>>)
    %c2_i32 = arith.constant 2 : i32
    %15 = arith.addi %0, %c2_i32 : i32
    %16 = arith.index_cast %15 : i32 to index
    %17 = memref.load %arg1[%16] : memref<16xi32, #tpu.memory_space<smem>>
    %c0_i32_8 = arith.constant 0 : i32
    %c0_i32_9 = arith.constant 0 : i32
    %18 = tpu.memref_slice %arg2[%17, %c0_i32_9] : memref<512x128xf32, #tpu.memory_space<any>> -> memref<1x128xf32, #tpu.memory_space<any>>
    %c2_i32_10 = arith.constant 2 : i32
    %c0_i32_11 = arith.constant 0 : i32
    %19 = tpu.memref_slice %arg4[%c2_i32_10, %c0_i32_11] : memref<16x128xf32, #tpu.memory_space<vmem>> -> memref<1x128xf32, #tpu.memory_space<vmem>>
    %20 = tpu.memref_slice %arg5[%c0_i32_8] : memref<1x!tpu.dma_semaphore, #tpu.memory_space<semaphore_mem>> -> memref<1x!tpu.dma_semaphore, #tpu.memory_space<semaphore_mem>>
    %21 = tpu.memref_squeeze %20 : memref<1x!tpu.dma_semaphore, #tpu.memory_space<semaphore_mem>> -> memref<!tpu.dma_semaphore, #tpu.memory_space<semaphore_mem>>
    tpu.enqueue_dma source(%18 : memref<1x128xf32, #tpu.memory_space<any>>) target(%19 : memref<1x128xf32, #tpu.memory_space<vmem>>) target_semaphore(%21 : memref<!tpu.dma_semaphore, #tpu.memory_space<semaphore_mem>>)
    %c3_i32 = arith.constant 3 : i32
    %22 = arith.addi %0, %c3_i32 : i32
    %23 = arith.index_cast %22 : i32 to index
    %24 = memref.load %arg1[%23] : memref<16xi32, #tpu.memory_space<smem>>
    %c0_i32_12 = arith.constant 0 : i32
    %c0_i32_13 = arith.constant 0 : i32
    %25 = tpu.memref_slice %arg2[%24, %c0_i32_13] : memref<512x128xf32, #tpu.memory_space<any>> -> memref<1x128xf32, #tpu.memory_space<any>>
    %c3_i32_14 = arith.constant 3 : i32
    %c0_i32_15 = arith.constant 0 : i32
    %26 = tpu.memref_slice %arg4[%c3_i32_14, %c0_i32_15] : memref<16x128xf32, #tpu.memory_space<vmem>> -> memref<1x128xf32, #tpu.memory_space<vmem>>
    %27 = tpu.memref_slice %arg5[%c0_i32_12] : memref<1x!tpu.dma_semaphore, #tpu.memory_space<semaphore_mem>> -> memref<1x!tpu.dma_semaphore, #tpu.memory_space<semaphore_mem>>
    %28 = tpu.memref_squeeze %27 : memref<1x!tpu.dma_semaphore, #tpu.memory_space<semaphore_mem>> -> memref<!tpu.dma_semaphore, #tpu.memory_space<semaphore_mem>>
    tpu.enqueue_dma source(%25 : memref<1x128xf32, #tpu.memory_space<any>>) target(%26 : memref<1x128xf32, #tpu.memory_space<vmem>>) target_semaphore(%28 : memref<!tpu.dma_semaphore, #tpu.memory_space<semaphore_mem>>)
    %c4_i32 = arith.constant 4 : i32
    %29 = arith.addi %0, %c4_i32 : i32
    %30 = arith.index_cast %29 : i32 to index
    %31 = memref.load %arg1[%30] : memref<16xi32, #tpu.memory_space<smem>>
    %c0_i32_16 = arith.constant 0 : i32
    %c0_i32_17 = arith.constant 0 : i32
    %32 = tpu.memref_slice %arg2[%31, %c0_i32_17] : memref<512x128xf32, #tpu.memory_space<any>> -> memref<1x128xf32, #tpu.memory_space<any>>
    %c4_i32_18 = arith.constant 4 : i32
    %c0_i32_19 = arith.constant 0 : i32
    %33 = tpu.memref_slice %arg4[%c4_i32_18, %c0_i32_19] : memref<16x128xf32, #tpu.memory_space<vmem>> -> memref<1x128xf32, #tpu.memory_space<vmem>>
    %34 = tpu.memref_slice %arg5[%c0_i32_16] : memref<1x!tpu.dma_semaphore, #tpu.memory_space<semaphore_mem>> -> memref<1x!tpu.dma_semaphore, #tpu.memory_space<semaphore_mem>>
    %35 = tpu.memref_squeeze %34 : memref<1x!tpu.dma_semaphore, #tpu.memory_space<semaphore_mem>> -> memref<!tpu.dma_semaphore, #tpu.memory_space<semaphore_mem>>
    tpu.enqueue_dma source(%32 : memref<1x128xf32, #tpu.memory_space<any>>) target(%33 : memref<1x128xf32, #tpu.memory_space<vmem>>) target_semaphore(%35 : memref<!tpu.dma_semaphore, #tpu.memory_space<semaphore_mem>>)
    %c5_i32 = arith.constant 5 : i32
    %36 = arith.addi %0, %c5_i32 : i32
    %37 = arith.index_cast %36 : i32 to index
    %38 = memref.load %arg1[%37] : memref<16xi32, #tpu.memory_space<smem>>
    %c0_i32_20 = arith.constant 0 : i32
    %c0_i32_21 = arith.constant 0 : i32
    %39 = tpu.memref_slice %arg2[%38, %c0_i32_21] : memref<512x128xf32, #tpu.memory_space<any>> -> memref<1x128xf32, #tpu.memory_space<any>>
    %c5_i32_22 = arith.constant 5 : i32
    %c0_i32_23 = arith.constant 0 : i32
    %40 = tpu.memref_slice %arg4[%c5_i32_22, %c0_i32_23] : memref<16x128xf32, #tpu.memory_space<vmem>> -> memref<1x128xf32, #tpu.memory_space<vmem>>
    %41 = tpu.memref_slice %arg5[%c0_i32_20] : memref<1x!tpu.dma_semaphore, #tpu.memory_space<semaphore_mem>> -> memref<1x!tpu.dma_semaphore, #tpu.memory_space<semaphore_mem>>
    %42 = tpu.memref_squeeze %41 : memref<1x!tpu.dma_semaphore, #tpu.memory_space<semaphore_mem>> -> memref<!tpu.dma_semaphore, #tpu.memory_space<semaphore_mem>>
    tpu.enqueue_dma source(%39 : memref<1x128xf32, #tpu.memory_space<any>>) target(%40 : memref<1x128xf32, #tpu.memory_space<vmem>>) target_semaphore(%42 : memref<!tpu.dma_semaphore, #tpu.memory_space<semaphore_mem>>)
    %c6_i32 = arith.constant 6 : i32
    %43 = arith.addi %0, %c6_i32 : i32
    %44 = arith.index_cast %43 : i32 to index
    %45 = memref.load %arg1[%44] : memref<16xi32, #tpu.memory_space<smem>>
    %c0_i32_24 = arith.constant 0 : i32
    %c0_i32_25 = arith.constant 0 : i32
    %46 = tpu.memref_slice %arg2[%45, %c0_i32_25] : memref<512x128xf32, #tpu.memory_space<any>> -> memref<1x128xf32, #tpu.memory_space<any>>
    %c6_i32_26 = arith.constant 6 : i32
    %c0_i32_27 = arith.constant 0 : i32
    %47 = tpu.memref_slice %arg4[%c6_i32_26, %c0_i32_27] : memref<16x128xf32, #tpu.memory_space<vmem>> -> memref<1x128xf32, #tpu.memory_space<vmem>>
    %48 = tpu.memref_slice %arg5[%c0_i32_24] : memref<1x!tpu.dma_semaphore, #tpu.memory_space<semaphore_mem>> -> memref<1x!tpu.dma_semaphore, #tpu.memory_space<semaphore_mem>>
    %49 = tpu.memref_squeeze %48 : memref<1x!tpu.dma_semaphore, #tpu.memory_space<semaphore_mem>> -> memref<!tpu.dma_semaphore, #tpu.memory_space<semaphore_mem>>
    tpu.enqueue_dma source(%46 : memref<1x128xf32, #tpu.memory_space<any>>) target(%47 : memref<1x128xf32, #tpu.memory_space<vmem>>) target_semaphore(%49 : memref<!tpu.dma_semaphore, #tpu.memory_space<semaphore_mem>>)
    %c7_i32 = arith.constant 7 : i32
    %50 = arith.addi %0, %c7_i32 : i32
    %51 = arith.index_cast %50 : i32 to index
    %52 = memref.load %arg1[%51] : memref<16xi32, #tpu.memory_space<smem>>
    %c0_i32_28 = arith.constant 0 : i32
    %c0_i32_29 = arith.constant 0 : i32
    %53 = tpu.memref_slice %arg2[%52, %c0_i32_29] : memref<512x128xf32, #tpu.memory_space<any>> -> memref<1x128xf32, #tpu.memory_space<any>>
    %c7_i32_30 = arith.constant 7 : i32
    %c0_i32_31 = arith.constant 0 : i32
    %54 = tpu.memref_slice %arg4[%c7_i32_30, %c0_i32_31] : memref<16x128xf32, #tpu.memory_space<vmem>> -> memref<1x128xf32, #tpu.memory_space<vmem>>
    %55 = tpu.memref_slice %arg5[%c0_i32_28] : memref<1x!tpu.dma_semaphore, #tpu.memory_space<semaphore_mem>> -> memref<1x!tpu.dma_semaphore, #tpu.memory_space<semaphore_mem>>
    %56 = tpu.memref_squeeze %55 : memref<1x!tpu.dma_semaphore, #tpu.memory_space<semaphore_mem>> -> memref<!tpu.dma_semaphore, #tpu.memory_space<semaphore_mem>>
    tpu.enqueue_dma source(%53 : memref<1x128xf32, #tpu.memory_space<any>>) target(%54 : memref<1x128xf32, #tpu.memory_space<vmem>>) target_semaphore(%56 : memref<!tpu.dma_semaphore, #tpu.memory_space<semaphore_mem>>)
    %c8_i32 = arith.constant 8 : i32
    %57 = arith.addi %0, %c8_i32 : i32
    %58 = arith.index_cast %57 : i32 to index
    %59 = memref.load %arg1[%58] : memref<16xi32, #tpu.memory_space<smem>>
    %c0_i32_32 = arith.constant 0 : i32
    %c0_i32_33 = arith.constant 0 : i32
    %60 = tpu.memref_slice %arg2[%59, %c0_i32_33] : memref<512x128xf32, #tpu.memory_space<any>> -> memref<1x128xf32, #tpu.memory_space<any>>
    %c8_i32_34 = arith.constant 8 : i32
    %c0_i32_35 = arith.constant 0 : i32
    %61 = tpu.memref_slice %arg4[%c8_i32_34, %c0_i32_35] : memref<16x128xf32, #tpu.memory_space<vmem>> -> memref<1x128xf32, #tpu.memory_space<vmem>>
    %62 = tpu.memref_slice %arg5[%c0_i32_32] : memref<1x!tpu.dma_semaphore, #tpu.memory_space<semaphore_mem>> -> memref<1x!tpu.dma_semaphore, #tpu.memory_space<semaphore_mem>>
    %63 = tpu.memref_squeeze %62 : memref<1x!tpu.dma_semaphore, #tpu.memory_space<semaphore_mem>> -> memref<!tpu.dma_semaphore, #tpu.memory_space<semaphore_mem>>
    tpu.enqueue_dma source(%60 : memref<1x128xf32, #tpu.memory_space<any>>) target(%61 : memref<1x128xf32, #tpu.memory_space<vmem>>) target_semaphore(%63 : memref<!tpu.dma_semaphore, #tpu.memory_space<semaphore_mem>>)
    %c9_i32 = arith.constant 9 : i32
    %64 = arith.addi %0, %c9_i32 : i32
    %65 = arith.index_cast %64 : i32 to index
    %66 = memref.load %arg1[%65] : memref<16xi32, #tpu.memory_space<smem>>
    %c0_i32_36 = arith.constant 0 : i32
    %c0_i32_37 = arith.constant 0 : i32
    %67 = tpu.memref_slice %arg2[%66, %c0_i32_37] : memref<512x128xf32, #tpu.memory_space<any>> -> memref<1x128xf32, #tpu.memory_space<any>>
    %c9_i32_38 = arith.constant 9 : i32
    %c0_i32_39 = arith.constant 0 : i32
    %68 = tpu.memref_slice %arg4[%c9_i32_38, %c0_i32_39] : memref<16x128xf32, #tpu.memory_space<vmem>> -> memref<1x128xf32, #tpu.memory_space<vmem>>
    %69 = tpu.memref_slice %arg5[%c0_i32_36] : memref<1x!tpu.dma_semaphore, #tpu.memory_space<semaphore_mem>> -> memref<1x!tpu.dma_semaphore, #tpu.memory_space<semaphore_mem>>
    %70 = tpu.memref_squeeze %69 : memref<1x!tpu.dma_semaphore, #tpu.memory_space<semaphore_mem>> -> memref<!tpu.dma_semaphore, #tpu.memory_space<semaphore_mem>>
    tpu.enqueue_dma source(%67 : memref<1x128xf32, #tpu.memory_space<any>>) target(%68 : memref<1x128xf32, #tpu.memory_space<vmem>>) target_semaphore(%70 : memref<!tpu.dma_semaphore, #tpu.memory_space<semaphore_mem>>)
    %c10_i32 = arith.constant 10 : i32
    %71 = arith.addi %0, %c10_i32 : i32
    %72 = arith.index_cast %71 : i32 to index
    %73 = memref.load %arg1[%72] : memref<16xi32, #tpu.memory_space<smem>>
    %c0_i32_40 = arith.constant 0 : i32
    %c0_i32_41 = arith.constant 0 : i32
    %74 = tpu.memref_slice %arg2[%73, %c0_i32_41] : memref<512x128xf32, #tpu.memory_space<any>> -> memref<1x128xf32, #tpu.memory_space<any>>
    %c10_i32_42 = arith.constant 10 : i32
    %c0_i32_43 = arith.constant 0 : i32
    %75 = tpu.memref_slice %arg4[%c10_i32_42, %c0_i32_43] : memref<16x128xf32, #tpu.memory_space<vmem>> -> memref<1x128xf32, #tpu.memory_space<vmem>>
    %76 = tpu.memref_slice %arg5[%c0_i32_40] : memref<1x!tpu.dma_semaphore, #tpu.memory_space<semaphore_mem>> -> memref<1x!tpu.dma_semaphore, #tpu.memory_space<semaphore_mem>>
    %77 = tpu.memref_squeeze %76 : memref<1x!tpu.dma_semaphore, #tpu.memory_space<semaphore_mem>> -> memref<!tpu.dma_semaphore, #tpu.memory_space<semaphore_mem>>
    tpu.enqueue_dma source(%74 : memref<1x128xf32, #tpu.memory_space<any>>) target(%75 : memref<1x128xf32, #tpu.memory_space<vmem>>) target_semaphore(%77 : memref<!tpu.dma_semaphore, #tpu.memory_space<semaphore_mem>>)
    %c11_i32 = arith.constant 11 : i32
    %78 = arith.addi %0, %c11_i32 : i32
    %79 = arith.index_cast %78 : i32 to index
    %80 = memref.load %arg1[%79] : memref<16xi32, #tpu.memory_space<smem>>
    %c0_i32_44 = arith.constant 0 : i32
    %c0_i32_45 = arith.constant 0 : i32
    %81 = tpu.memref_slice %arg2[%80, %c0_i32_45] : memref<512x128xf32, #tpu.memory_space<any>> -> memref<1x128xf32, #tpu.memory_space<any>>
    %c11_i32_46 = arith.constant 11 : i32
    %c0_i32_47 = arith.constant 0 : i32
    %82 = tpu.memref_slice %arg4[%c11_i32_46, %c0_i32_47] : memref<16x128xf32, #tpu.memory_space<vmem>> -> memref<1x128xf32, #tpu.memory_space<vmem>>
    %83 = tpu.memref_slice %arg5[%c0_i32_44] : memref<1x!tpu.dma_semaphore, #tpu.memory_space<semaphore_mem>> -> memref<1x!tpu.dma_semaphore, #tpu.memory_space<semaphore_mem>>
    %84 = tpu.memref_squeeze %83 : memref<1x!tpu.dma_semaphore, #tpu.memory_space<semaphore_mem>> -> memref<!tpu.dma_semaphore, #tpu.memory_space<semaphore_mem>>
    tpu.enqueue_dma source(%81 : memref<1x128xf32, #tpu.memory_space<any>>) target(%82 : memref<1x128xf32, #tpu.memory_space<vmem>>) target_semaphore(%84 : memref<!tpu.dma_semaphore, #tpu.memory_space<semaphore_mem>>)
    %c12_i32 = arith.constant 12 : i32
    %85 = arith.addi %0, %c12_i32 : i32
    %86 = arith.index_cast %85 : i32 to index
    %87 = memref.load %arg1[%86] : memref<16xi32, #tpu.memory_space<smem>>
    %c0_i32_48 = arith.constant 0 : i32
    %c0_i32_49 = arith.constant 0 : i32
    %88 = tpu.memref_slice %arg2[%87, %c0_i32_49] : memref<512x128xf32, #tpu.memory_space<any>> -> memref<1x128xf32, #tpu.memory_space<any>>
    %c12_i32_50 = arith.constant 12 : i32
    %c0_i32_51 = arith.constant 0 : i32
    %89 = tpu.memref_slice %arg4[%c12_i32_50, %c0_i32_51] : memref<16x128xf32, #tpu.memory_space<vmem>> -> memref<1x128xf32, #tpu.memory_space<vmem>>
    %90 = tpu.memref_slice %arg5[%c0_i32_48] : memref<1x!tpu.dma_semaphore, #tpu.memory_space<semaphore_mem>> -> memref<1x!tpu.dma_semaphore, #tpu.memory_space<semaphore_mem>>
    %91 = tpu.memref_squeeze %90 : memref<1x!tpu.dma_semaphore, #tpu.memory_space<semaphore_mem>> -> memref<!tpu.dma_semaphore, #tpu.memory_space<semaphore_mem>>
    tpu.enqueue_dma source(%88 : memref<1x128xf32, #tpu.memory_space<any>>) target(%89 : memref<1x128xf32, #tpu.memory_space<vmem>>) target_semaphore(%91 : memref<!tpu.dma_semaphore, #tpu.memory_space<semaphore_mem>>)
    %c13_i32 = arith.constant 13 : i32
    %92 = arith.addi %0, %c13_i32 : i32
    %93 = arith.index_cast %92 : i32 to index
    %94 = memref.load %arg1[%93] : memref<16xi32, #tpu.memory_space<smem>>
    %c0_i32_52 = arith.constant 0 : i32
    %c0_i32_53 = arith.constant 0 : i32
    %95 = tpu.memref_slice %arg2[%94, %c0_i32_53] : memref<512x128xf32, #tpu.memory_space<any>> -> memref<1x128xf32, #tpu.memory_space<any>>
    %c13_i32_54 = arith.constant 13 : i32
    %c0_i32_55 = arith.constant 0 : i32
    %96 = tpu.memref_slice %arg4[%c13_i32_54, %c0_i32_55] : memref<16x128xf32, #tpu.memory_space<vmem>> -> memref<1x128xf32, #tpu.memory_space<vmem>>
    %97 = tpu.memref_slice %arg5[%c0_i32_52] : memref<1x!tpu.dma_semaphore, #tpu.memory_space<semaphore_mem>> -> memref<1x!tpu.dma_semaphore, #tpu.memory_space<semaphore_mem>>
    %98 = tpu.memref_squeeze %97 : memref<1x!tpu.dma_semaphore, #tpu.memory_space<semaphore_mem>> -> memref<!tpu.dma_semaphore, #tpu.memory_space<semaphore_mem>>
    tpu.enqueue_dma source(%95 : memref<1x128xf32, #tpu.memory_space<any>>) target(%96 : memref<1x128xf32, #tpu.memory_space<vmem>>) target_semaphore(%98 : memref<!tpu.dma_semaphore, #tpu.memory_space<semaphore_mem>>)
    %c14_i32 = arith.constant 14 : i32
    %99 = arith.addi %0, %c14_i32 : i32
    %100 = arith.index_cast %99 : i32 to index
    %101 = memref.load %arg1[%100] : memref<16xi32, #tpu.memory_space<smem>>
    %c0_i32_56 = arith.constant 0 : i32
    %c0_i32_57 = arith.constant 0 : i32
    %102 = tpu.memref_slice %arg2[%101, %c0_i32_57] : memref<512x128xf32, #tpu.memory_space<any>> -> memref<1x128xf32, #tpu.memory_space<any>>
    %c14_i32_58 = arith.constant 14 : i32
    %c0_i32_59 = arith.constant 0 : i32
    %103 = tpu.memref_slice %arg4[%c14_i32_58, %c0_i32_59] : memref<16x128xf32, #tpu.memory_space<vmem>> -> memref<1x128xf32, #tpu.memory_space<vmem>>
    %104 = tpu.memref_slice %arg5[%c0_i32_56] : memref<1x!tpu.dma_semaphore, #tpu.memory_space<semaphore_mem>> -> memref<1x!tpu.dma_semaphore, #tpu.memory_space<semaphore_mem>>
    %105 = tpu.memref_squeeze %104 : memref<1x!tpu.dma_semaphore, #tpu.memory_space<semaphore_mem>> -> memref<!tpu.dma_semaphore, #tpu.memory_space<semaphore_mem>>
    tpu.enqueue_dma source(%102 : memref<1x128xf32, #tpu.memory_space<any>>) target(%103 : memref<1x128xf32, #tpu.memory_space<vmem>>) target_semaphore(%105 : memref<!tpu.dma_semaphore, #tpu.memory_space<semaphore_mem>>)
    %c15_i32 = arith.constant 15 : i32
    %106 = arith.addi %0, %c15_i32 : i32
    %107 = arith.index_cast %106 : i32 to index
    %108 = memref.load %arg1[%107] : memref<16xi32, #tpu.memory_space<smem>>
    %c0_i32_60 = arith.constant 0 : i32
    %c0_i32_61 = arith.constant 0 : i32
    %109 = tpu.memref_slice %arg2[%108, %c0_i32_61] : memref<512x128xf32, #tpu.memory_space<any>> -> memref<1x128xf32, #tpu.memory_space<any>>
    %c15_i32_62 = arith.constant 15 : i32
    %c0_i32_63 = arith.constant 0 : i32
    %110 = tpu.memref_slice %arg4[%c15_i32_62, %c0_i32_63] : memref<16x128xf32, #tpu.memory_space<vmem>> -> memref<1x128xf32, #tpu.memory_space<vmem>>
    %111 = tpu.memref_slice %arg5[%c0_i32_60] : memref<1x!tpu.dma_semaphore, #tpu.memory_space<semaphore_mem>> -> memref<1x!tpu.dma_semaphore, #tpu.memory_space<semaphore_mem>>
    %112 = tpu.memref_squeeze %111 : memref<1x!tpu.dma_semaphore, #tpu.memory_space<semaphore_mem>> -> memref<!tpu.dma_semaphore, #tpu.memory_space<semaphore_mem>>
    tpu.enqueue_dma source(%109 : memref<1x128xf32, #tpu.memory_space<any>>) target(%110 : memref<1x128xf32, #tpu.memory_space<vmem>>) target_semaphore(%112 : memref<!tpu.dma_semaphore, #tpu.memory_space<semaphore_mem>>)
    %c0_i32_64 = arith.constant 0 : i32
    %c0_i32_65 = arith.constant 0 : i32
    %113 = tpu.memref_slice %arg2[%3, %c0_i32_65] : memref<512x128xf32, #tpu.memory_space<any>> -> memref<1x128xf32, #tpu.memory_space<any>>
    %c0_i32_66 = arith.constant 0 : i32
    %c0_i32_67 = arith.constant 0 : i32
    %114 = tpu.memref_slice %arg4[%c0_i32_66, %c0_i32_67] : memref<16x128xf32, #tpu.memory_space<vmem>> -> memref<1x128xf32, #tpu.memory_space<vmem>>
    %115 = tpu.memref_slice %arg5[%c0_i32_64] : memref<1x!tpu.dma_semaphore, #tpu.memory_space<semaphore_mem>> -> memref<1x!tpu.dma_semaphore, #tpu.memory_space<semaphore_mem>>
    %116 = tpu.memref_squeeze %115 : memref<1x!tpu.dma_semaphore, #tpu.memory_space<semaphore_mem>> -> memref<!tpu.dma_semaphore, #tpu.memory_space<semaphore_mem>>
    tpu.wait_dma2 semaphore(%116 : memref<!tpu.dma_semaphore, #tpu.memory_space<semaphore_mem>>) src(%113 : memref<1x128xf32, #tpu.memory_space<any>>) dst(%114 : memref<1x128xf32, #tpu.memory_space<vmem>>)
    %c0_i32_68 = arith.constant 0 : i32
    %c0_i32_69 = arith.constant 0 : i32
    %117 = tpu.memref_slice %arg2[%10, %c0_i32_69] : memref<512x128xf32, #tpu.memory_space<any>> -> memref<1x128xf32, #tpu.memory_space<any>>
    %c1_i32_70 = arith.constant 1 : i32
    %c0_i32_71 = arith.constant 0 : i32
    %118 = tpu.memref_slice %arg4[%c1_i32_70, %c0_i32_71] : memref<16x128xf32, #tpu.memory_space<vmem>> -> memref<1x128xf32, #tpu.memory_space<vmem>>
    %119 = tpu.memref_slice %arg5[%c0_i32_68] : memref<1x!tpu.dma_semaphore, #tpu.memory_space<semaphore_mem>> -> memref<1x!tpu.dma_semaphore, #tpu.memory_space<semaphore_mem>>
    %120 = tpu.memref_squeeze %119 : memref<1x!tpu.dma_semaphore, #tpu.memory_space<semaphore_mem>> -> memref<!tpu.dma_semaphore, #tpu.memory_space<semaphore_mem>>
    tpu.wait_dma2 semaphore(%120 : memref<!tpu.dma_semaphore, #tpu.memory_space<semaphore_mem>>) src(%117 : memref<1x128xf32, #tpu.memory_space<any>>) dst(%118 : memref<1x128xf32, #tpu.memory_space<vmem>>)
    %c0_i32_72 = arith.constant 0 : i32
    %c0_i32_73 = arith.constant 0 : i32
    %121 = tpu.memref_slice %arg2[%17, %c0_i32_73] : memref<512x128xf32, #tpu.memory_space<any>> -> memref<1x128xf32, #tpu.memory_space<any>>
    %c2_i32_74 = arith.constant 2 : i32
    %c0_i32_75 = arith.constant 0 : i32
    %122 = tpu.memref_slice %arg4[%c2_i32_74, %c0_i32_75] : memref<16x128xf32, #tpu.memory_space<vmem>> -> memref<1x128xf32, #tpu.memory_space<vmem>>
    %123 = tpu.memref_slice %arg5[%c0_i32_72] : memref<1x!tpu.dma_semaphore, #tpu.memory_space<semaphore_mem>> -> memref<1x!tpu.dma_semaphore, #tpu.memory_space<semaphore_mem>>
    %124 = tpu.memref_squeeze %123 : memref<1x!tpu.dma_semaphore, #tpu.memory_space<semaphore_mem>> -> memref<!tpu.dma_semaphore, #tpu.memory_space<semaphore_mem>>
    tpu.wait_dma2 semaphore(%124 : memref<!tpu.dma_semaphore, #tpu.memory_space<semaphore_mem>>) src(%121 : memref<1x128xf32, #tpu.memory_space<any>>) dst(%122 : memref<1x128xf32, #tpu.memory_space<vmem>>)
    %c0_i32_76 = arith.constant 0 : i32
    %c0_i32_77 = arith.constant 0 : i32
    %125 = tpu.memref_slice %arg2[%24, %c0_i32_77] : memref<512x128xf32, #tpu.memory_space<any>> -> memref<1x128xf32, #tpu.memory_space<any>>
    %c3_i32_78 = arith.constant 3 : i32
    %c0_i32_79 = arith.constant 0 : i32
    %126 = tpu.memref_slice %arg4[%c3_i32_78, %c0_i32_79] : memref<16x128xf32, #tpu.memory_space<vmem>> -> memref<1x128xf32, #tpu.memory_space<vmem>>
    %127 = tpu.memref_slice %arg5[%c0_i32_76] : memref<1x!tpu.dma_semaphore, #tpu.memory_space<semaphore_mem>> -> memref<1x!tpu.dma_semaphore, #tpu.memory_space<semaphore_mem>>
    %128 = tpu.memref_squeeze %127 : memref<1x!tpu.dma_semaphore, #tpu.memory_space<semaphore_mem>> -> memref<!tpu.dma_semaphore, #tpu.memory_space<semaphore_mem>>
    tpu.wait_dma2 semaphore(%128 : memref<!tpu.dma_semaphore, #tpu.memory_space<semaphore_mem>>) src(%125 : memref<1x128xf32, #tpu.memory_space<any>>) dst(%126 : memref<1x128xf32, #tpu.memory_space<vmem>>)
    %c0_i32_80 = arith.constant 0 : i32
    %c0_i32_81 = arith.constant 0 : i32
    %129 = tpu.memref_slice %arg2[%31, %c0_i32_81] : memref<512x128xf32, #tpu.memory_space<any>> -> memref<1x128xf32, #tpu.memory_space<any>>
    %c4_i32_82 = arith.constant 4 : i32
    %c0_i32_83 = arith.constant 0 : i32
    %130 = tpu.memref_slice %arg4[%c4_i32_82, %c0_i32_83] : memref<16x128xf32, #tpu.memory_space<vmem>> -> memref<1x128xf32, #tpu.memory_space<vmem>>
    %131 = tpu.memref_slice %arg5[%c0_i32_80] : memref<1x!tpu.dma_semaphore, #tpu.memory_space<semaphore_mem>> -> memref<1x!tpu.dma_semaphore, #tpu.memory_space<semaphore_mem>>
    %132 = tpu.memref_squeeze %131 : memref<1x!tpu.dma_semaphore, #tpu.memory_space<semaphore_mem>> -> memref<!tpu.dma_semaphore, #tpu.memory_space<semaphore_mem>>
    tpu.wait_dma2 semaphore(%132 : memref<!tpu.dma_semaphore, #tpu.memory_space<semaphore_mem>>) src(%129 : memref<1x128xf32, #tpu.memory_space<any>>) dst(%130 : memref<1x128xf32, #tpu.memory_space<vmem>>)
    %c0_i32_84 = arith.constant 0 : i32
    %c0_i32_85 = arith.constant 0 : i32
    %133 = tpu.memref_slice %arg2[%38, %c0_i32_85] : memref<512x128xf32, #tpu.memory_space<any>> -> memref<1x128xf32, #tpu.memory_space<any>>
    %c5_i32_86 = arith.constant 5 : i32
    %c0_i32_87 = arith.constant 0 : i32
    %134 = tpu.memref_slice %arg4[%c5_i32_86, %c0_i32_87] : memref<16x128xf32, #tpu.memory_space<vmem>> -> memref<1x128xf32, #tpu.memory_space<vmem>>
    %135 = tpu.memref_slice %arg5[%c0_i32_84] : memref<1x!tpu.dma_semaphore, #tpu.memory_space<semaphore_mem>> -> memref<1x!tpu.dma_semaphore, #tpu.memory_space<semaphore_mem>>
    %136 = tpu.memref_squeeze %135 : memref<1x!tpu.dma_semaphore, #tpu.memory_space<semaphore_mem>> -> memref<!tpu.dma_semaphore, #tpu.memory_space<semaphore_mem>>
    tpu.wait_dma2 semaphore(%136 : memref<!tpu.dma_semaphore, #tpu.memory_space<semaphore_mem>>) src(%133 : memref<1x128xf32, #tpu.memory_space<any>>) dst(%134 : memref<1x128xf32, #tpu.memory_space<vmem>>)
    %c0_i32_88 = arith.constant 0 : i32
    %c0_i32_89 = arith.constant 0 : i32
    %137 = tpu.memref_slice %arg2[%45, %c0_i32_89] : memref<512x128xf32, #tpu.memory_space<any>> -> memref<1x128xf32, #tpu.memory_space<any>>
    %c6_i32_90 = arith.constant 6 : i32
    %c0_i32_91 = arith.constant 0 : i32
    %138 = tpu.memref_slice %arg4[%c6_i32_90, %c0_i32_91] : memref<16x128xf32, #tpu.memory_space<vmem>> -> memref<1x128xf32, #tpu.memory_space<vmem>>
    %139 = tpu.memref_slice %arg5[%c0_i32_88] : memref<1x!tpu.dma_semaphore, #tpu.memory_space<semaphore_mem>> -> memref<1x!tpu.dma_semaphore, #tpu.memory_space<semaphore_mem>>
    %140 = tpu.memref_squeeze %139 : memref<1x!tpu.dma_semaphore, #tpu.memory_space<semaphore_mem>> -> memref<!tpu.dma_semaphore, #tpu.memory_space<semaphore_mem>>
    tpu.wait_dma2 semaphore(%140 : memref<!tpu.dma_semaphore, #tpu.memory_space<semaphore_mem>>) src(%137 : memref<1x128xf32, #tpu.memory_space<any>>) dst(%138 : memref<1x128xf32, #tpu.memory_space<vmem>>)
    %c0_i32_92 = arith.constant 0 : i32
    %c0_i32_93 = arith.constant 0 : i32
    %141 = tpu.memref_slice %arg2[%52, %c0_i32_93] : memref<512x128xf32, #tpu.memory_space<any>> -> memref<1x128xf32, #tpu.memory_space<any>>
    %c7_i32_94 = arith.constant 7 : i32
    %c0_i32_95 = arith.constant 0 : i32
    %142 = tpu.memref_slice %arg4[%c7_i32_94, %c0_i32_95] : memref<16x128xf32, #tpu.memory_space<vmem>> -> memref<1x128xf32, #tpu.memory_space<vmem>>
    %143 = tpu.memref_slice %arg5[%c0_i32_92] : memref<1x!tpu.dma_semaphore, #tpu.memory_space<semaphore_mem>> -> memref<1x!tpu.dma_semaphore, #tpu.memory_space<semaphore_mem>>
    %144 = tpu.memref_squeeze %143 : memref<1x!tpu.dma_semaphore, #tpu.memory_space<semaphore_mem>> -> memref<!tpu.dma_semaphore, #tpu.memory_space<semaphore_mem>>
    tpu.wait_dma2 semaphore(%144 : memref<!tpu.dma_semaphore, #tpu.memory_space<semaphore_mem>>) src(%141 : memref<1x128xf32, #tpu.memory_space<any>>) dst(%142 : memref<1x128xf32, #tpu.memory_space<vmem>>)
    %c0_i32_96 = arith.constant 0 : i32
    %c0_i32_97 = arith.constant 0 : i32
    %145 = tpu.memref_slice %arg2[%59, %c0_i32_97] : memref<512x128xf32, #tpu.memory_space<any>> -> memref<1x128xf32, #tpu.memory_space<any>>
    %c8_i32_98 = arith.constant 8 : i32
    %c0_i32_99 = arith.constant 0 : i32
    %146 = tpu.memref_slice %arg4[%c8_i32_98, %c0_i32_99] : memref<16x128xf32, #tpu.memory_space<vmem>> -> memref<1x128xf32, #tpu.memory_space<vmem>>
    %147 = tpu.memref_slice %arg5[%c0_i32_96] : memref<1x!tpu.dma_semaphore, #tpu.memory_space<semaphore_mem>> -> memref<1x!tpu.dma_semaphore, #tpu.memory_space<semaphore_mem>>
    %148 = tpu.memref_squeeze %147 : memref<1x!tpu.dma_semaphore, #tpu.memory_space<semaphore_mem>> -> memref<!tpu.dma_semaphore, #tpu.memory_space<semaphore_mem>>
    tpu.wait_dma2 semaphore(%148 : memref<!tpu.dma_semaphore, #tpu.memory_space<semaphore_mem>>) src(%145 : memref<1x128xf32, #tpu.memory_space<any>>) dst(%146 : memref<1x128xf32, #tpu.memory_space<vmem>>)
    %c0_i32_100 = arith.constant 0 : i32
    %c0_i32_101 = arith.constant 0 : i32
    %149 = tpu.memref_slice %arg2[%66, %c0_i32_101] : memref<512x128xf32, #tpu.memory_space<any>> -> memref<1x128xf32, #tpu.memory_space<any>>
    %c9_i32_102 = arith.constant 9 : i32
    %c0_i32_103 = arith.constant 0 : i32
    %150 = tpu.memref_slice %arg4[%c9_i32_102, %c0_i32_103] : memref<16x128xf32, #tpu.memory_space<vmem>> -> memref<1x128xf32, #tpu.memory_space<vmem>>
    %151 = tpu.memref_slice %arg5[%c0_i32_100] : memref<1x!tpu.dma_semaphore, #tpu.memory_space<semaphore_mem>> -> memref<1x!tpu.dma_semaphore, #tpu.memory_space<semaphore_mem>>
    %152 = tpu.memref_squeeze %151 : memref<1x!tpu.dma_semaphore, #tpu.memory_space<semaphore_mem>> -> memref<!tpu.dma_semaphore, #tpu.memory_space<semaphore_mem>>
    tpu.wait_dma2 semaphore(%152 : memref<!tpu.dma_semaphore, #tpu.memory_space<semaphore_mem>>) src(%149 : memref<1x128xf32, #tpu.memory_space<any>>) dst(%150 : memref<1x128xf32, #tpu.memory_space<vmem>>)
    %c0_i32_104 = arith.constant 0 : i32
    %c0_i32_105 = arith.constant 0 : i32
    %153 = tpu.memref_slice %arg2[%73, %c0_i32_105] : memref<512x128xf32, #tpu.memory_space<any>> -> memref<1x128xf32, #tpu.memory_space<any>>
    %c10_i32_106 = arith.constant 10 : i32
    %c0_i32_107 = arith.constant 0 : i32
    %154 = tpu.memref_slice %arg4[%c10_i32_106, %c0_i32_107] : memref<16x128xf32, #tpu.memory_space<vmem>> -> memref<1x128xf32, #tpu.memory_space<vmem>>
    %155 = tpu.memref_slice %arg5[%c0_i32_104] : memref<1x!tpu.dma_semaphore, #tpu.memory_space<semaphore_mem>> -> memref<1x!tpu.dma_semaphore, #tpu.memory_space<semaphore_mem>>
    %156 = tpu.memref_squeeze %155 : memref<1x!tpu.dma_semaphore, #tpu.memory_space<semaphore_mem>> -> memref<!tpu.dma_semaphore, #tpu.memory_space<semaphore_mem>>
    tpu.wait_dma2 semaphore(%156 : memref<!tpu.dma_semaphore, #tpu.memory_space<semaphore_mem>>) src(%153 : memref<1x128xf32, #tpu.memory_space<any>>) dst(%154 : memref<1x128xf32, #tpu.memory_space<vmem>>)
    %c0_i32_108 = arith.constant 0 : i32
    %c0_i32_109 = arith.constant 0 : i32
    %157 = tpu.memref_slice %arg2[%80, %c0_i32_109] : memref<512x128xf32, #tpu.memory_space<any>> -> memref<1x128xf32, #tpu.memory_space<any>>
    %c11_i32_110 = arith.constant 11 : i32
    %c0_i32_111 = arith.constant 0 : i32
    %158 = tpu.memref_slice %arg4[%c11_i32_110, %c0_i32_111] : memref<16x128xf32, #tpu.memory_space<vmem>> -> memref<1x128xf32, #tpu.memory_space<vmem>>
    %159 = tpu.memref_slice %arg5[%c0_i32_108] : memref<1x!tpu.dma_semaphore, #tpu.memory_space<semaphore_mem>> -> memref<1x!tpu.dma_semaphore, #tpu.memory_space<semaphore_mem>>
    %160 = tpu.memref_squeeze %159 : memref<1x!tpu.dma_semaphore, #tpu.memory_space<semaphore_mem>> -> memref<!tpu.dma_semaphore, #tpu.memory_space<semaphore_mem>>
    tpu.wait_dma2 semaphore(%160 : memref<!tpu.dma_semaphore, #tpu.memory_space<semaphore_mem>>) src(%157 : memref<1x128xf32, #tpu.memory_space<any>>) dst(%158 : memref<1x128xf32, #tpu.memory_space<vmem>>)
    %c0_i32_112 = arith.constant 0 : i32
    %c0_i32_113 = arith.constant 0 : i32
    %161 = tpu.memref_slice %arg2[%87, %c0_i32_113] : memref<512x128xf32, #tpu.memory_space<any>> -> memref<1x128xf32, #tpu.memory_space<any>>
    %c12_i32_114 = arith.constant 12 : i32
    %c0_i32_115 = arith.constant 0 : i32
    %162 = tpu.memref_slice %arg4[%c12_i32_114, %c0_i32_115] : memref<16x128xf32, #tpu.memory_space<vmem>> -> memref<1x128xf32, #tpu.memory_space<vmem>>
    %163 = tpu.memref_slice %arg5[%c0_i32_112] : memref<1x!tpu.dma_semaphore, #tpu.memory_space<semaphore_mem>> -> memref<1x!tpu.dma_semaphore, #tpu.memory_space<semaphore_mem>>
    %164 = tpu.memref_squeeze %163 : memref<1x!tpu.dma_semaphore, #tpu.memory_space<semaphore_mem>> -> memref<!tpu.dma_semaphore, #tpu.memory_space<semaphore_mem>>
    tpu.wait_dma2 semaphore(%164 : memref<!tpu.dma_semaphore, #tpu.memory_space<semaphore_mem>>) src(%161 : memref<1x128xf32, #tpu.memory_space<any>>) dst(%162 : memref<1x128xf32, #tpu.memory_space<vmem>>)
    %c0_i32_116 = arith.constant 0 : i32
    %c0_i32_117 = arith.constant 0 : i32
    %165 = tpu.memref_slice %arg2[%94, %c0_i32_117] : memref<512x128xf32, #tpu.memory_space<any>> -> memref<1x128xf32, #tpu.memory_space<any>>
    %c13_i32_118 = arith.constant 13 : i32
    %c0_i32_119 = arith.constant 0 : i32
    %166 = tpu.memref_slice %arg4[%c13_i32_118, %c0_i32_119] : memref<16x128xf32, #tpu.memory_space<vmem>> -> memref<1x128xf32, #tpu.memory_space<vmem>>
    %167 = tpu.memref_slice %arg5[%c0_i32_116] : memref<1x!tpu.dma_semaphore, #tpu.memory_space<semaphore_mem>> -> memref<1x!tpu.dma_semaphore, #tpu.memory_space<semaphore_mem>>
    %168 = tpu.memref_squeeze %167 : memref<1x!tpu.dma_semaphore, #tpu.memory_space<semaphore_mem>> -> memref<!tpu.dma_semaphore, #tpu.memory_space<semaphore_mem>>
    tpu.wait_dma2 semaphore(%168 : memref<!tpu.dma_semaphore, #tpu.memory_space<semaphore_mem>>) src(%165 : memref<1x128xf32, #tpu.memory_space<any>>) dst(%166 : memref<1x128xf32, #tpu.memory_space<vmem>>)
    %c0_i32_120 = arith.constant 0 : i32
    %c0_i32_121 = arith.constant 0 : i32
    %169 = tpu.memref_slice %arg2[%101, %c0_i32_121] : memref<512x128xf32, #tpu.memory_space<any>> -> memref<1x128xf32, #tpu.memory_space<any>>
    %c14_i32_122 = arith.constant 14 : i32
    %c0_i32_123 = arith.constant 0 : i32
    %170 = tpu.memref_slice %arg4[%c14_i32_122, %c0_i32_123] : memref<16x128xf32, #tpu.memory_space<vmem>> -> memref<1x128xf32, #tpu.memory_space<vmem>>
    %171 = tpu.memref_slice %arg5[%c0_i32_120] : memref<1x!tpu.dma_semaphore, #tpu.memory_space<semaphore_mem>> -> memref<1x!tpu.dma_semaphore, #tpu.memory_space<semaphore_mem>>
    %172 = tpu.memref_squeeze %171 : memref<1x!tpu.dma_semaphore, #tpu.memory_space<semaphore_mem>> -> memref<!tpu.dma_semaphore, #tpu.memory_space<semaphore_mem>>
    tpu.wait_dma2 semaphore(%172 : memref<!tpu.dma_semaphore, #tpu.memory_space<semaphore_mem>>) src(%169 : memref<1x128xf32, #tpu.memory_space<any>>) dst(%170 : memref<1x128xf32, #tpu.memory_space<vmem>>)
    %c0_i32_124 = arith.constant 0 : i32
    %c0_i32_125 = arith.constant 0 : i32
    %173 = tpu.memref_slice %arg2[%108, %c0_i32_125] : memref<512x128xf32, #tpu.memory_space<any>> -> memref<1x128xf32, #tpu.memory_space<any>>
    %c15_i32_126 = arith.constant 15 : i32
    %c0_i32_127 = arith.constant 0 : i32
    %174 = tpu.memref_slice %arg4[%c15_i32_126, %c0_i32_127] : memref<16x128xf32, #tpu.memory_space<vmem>> -> memref<1x128xf32, #tpu.memory_space<vmem>>
    %175 = tpu.memref_slice %arg5[%c0_i32_124] : memref<1x!tpu.dma_semaphore, #tpu.memory_space<semaphore_mem>> -> memref<1x!tpu.dma_semaphore, #tpu.memory_space<semaphore_mem>>
    %176 = tpu.memref_squeeze %175 : memref<1x!tpu.dma_semaphore, #tpu.memory_space<semaphore_mem>> -> memref<!tpu.dma_semaphore, #tpu.memory_space<semaphore_mem>>
    tpu.wait_dma2 semaphore(%176 : memref<!tpu.dma_semaphore, #tpu.memory_space<semaphore_mem>>) src(%173 : memref<1x128xf32, #tpu.memory_space<any>>) dst(%174 : memref<1x128xf32, #tpu.memory_space<vmem>>)
    %c0 = arith.constant 0 : index
    %c0_128 = arith.constant 0 : index
    %177 = vector.load %arg4[%c0, %c0_128] : memref<16x128xf32, #tpu.memory_space<vmem>>, vector<16x128xf32>
    %c0_129 = arith.constant 0 : index
    %c0_130 = arith.constant 0 : index
    %178 = vector.load %arg3[%c0_129, %c0_130] : memref<16x128xf32, #tpu.memory_space<vmem>>, vector<16x128xf32>
    tpu.vector_store %arg3[%c0_129, %c0_130], %177 {strides = array<i32>} : memref<16x128xf32, #tpu.memory_space<vmem>>, vector<16x128xf32>,
    return
  }
  func.func @transform_1(%arg0: i32, %arg1: memref<16xi32, #tpu.memory_space<smem>>) -> (i32, i32) {
    %c0_i32 = arith.constant 0 : i32
    %c0_i32_0 = arith.constant 0 : i32
    return %arg0, %c0_i32 : i32, i32
  }
}

</mosaic_0001>

<llo_original>
// kernel: tpu_custom_call.1
$region0: #{tpu_custom_call.1}
  #allocation0 [shape = 'u32[]', space=smem, size = 0x4, offset = 0x4, fixed_abs, tag = 'smem constant byte address 0x4 - core index']
  #allocation1 [shape = 'u32[144,128]{1,0:T(1,128)}', space=vmem, size = 0x12000, scoped, tag = 'internal scratch']
  #allocation2 [shape = 'f32[16,128]{1,0:T(8,128)}', space=vmem, size = 0x2000, scoped, tag = 'scratch operand']
  #allocation3 [shape = 's32[1]{0}', space=sflag, size = 0x4, scoped, tag = 'scratch operand']
  #allocation4 [shape = 's32[1]{0}', space=sflag, size = 0x4, scoped, tag = 'scoped memory for tpu_custom_call.1']
  #allocation5 [shape = 'u8[512]{0}', space=smem, size = 0x200, scoped, tag = 'prefetched SMEM operand 0']
  #allocation8 [shape = 's32[]', space=sflag, size = 0x4, offset = 0, fixed_abs, tag = 'sflag constant byte address 0x0 - dummy sync flag']
  #allocation9 [shape = 's32[]', space=sflag, size = 0x4, offset = 0, fixed_abs, tag = 'sflag constant byte address 0x0 - dummy sync flag']
  #allocation10 [shape = 'u32[]', space=smem, size = 0x4, offset = 0x44, fixed_abs, tag = 'smem constant byte address 0x44 - assertion arg 0']
  #allocation11 [shape = 'u32[]', space=smem, size = 0x4, offset = 0x48, fixed_abs, tag = 'smem constant byte address 0x48 - assertion arg 1']
  #allocation12 [shape = 's32[]', space=sflag, size = 0x4, offset = 0, fixed_abs, tag = 'sflag constant byte address 0x0 - dummy sync flag']
  #allocation13 [shape = 's32[]', space=sflag, size = 0x4, offset = 0, fixed_abs, tag = 'sflag constant byte address 0x0 - dummy sync flag']
  #allocation14 [shape = 's32[]', space=sflag, size = 0x4, offset = 0, fixed_abs, tag = 'sflag constant byte address 0x0 - dummy sync flag']
  #allocation15 [shape = 's32[]', space=sflag, size = 0x4, offset = 0, fixed_abs, tag = 'sflag constant byte address 0x0 - dummy sync flag']
  #allocation16 [shape = 's32[]', space=sflag, size = 0x4, offset = 0, fixed_abs, tag = 'sflag constant byte address 0x0 - dummy sync flag']
  #allocation17 [shape = 's32[]', space=sflag, size = 0x4, offset = 0, fixed_abs, tag = 'sflag constant byte address 0x0 - dummy sync flag']
  #allocation18 [shape = 's32[]', space=sflag, size = 0x4, offset = 0, fixed_abs, tag = 'sflag constant byte address 0x0 - dummy sync flag']
  #allocation19 [shape = 's32[]', space=sflag, size = 0x4, offset = 0, fixed_abs, tag = 'sflag constant byte address 0x0 - dummy sync flag']
  #allocation20 [shape = 's32[]', space=sflag, size = 0x4, offset = 0, fixed_abs, tag = 'sflag constant byte address 0x0 - dummy sync flag']
  #allocation21 [shape = 's32[]', space=sflag, size = 0x4, offset = 0, fixed_abs, tag = 'sflag constant byte address 0x0 - dummy sync flag']
  #allocation22 [shape = 's32[]', space=sflag, size = 0x4, offset = 0, fixed_abs, tag = 'sflag constant byte address 0x0 - dummy sync flag']
  #allocation23 [shape = 's32[]', space=sflag, size = 0x4, offset = 0, fixed_abs, tag = 'sflag constant byte address 0x0 - dummy sync flag']
  #allocation24 [shape = 's32[]', space=sflag, size = 0x4, offset = 0, fixed_abs, tag = 'sflag constant byte address 0x0 - dummy sync flag']
  #allocation25 [shape = 's32[]', space=sflag, size = 0x4, offset = 0, fixed_abs, tag = 'sflag constant byte address 0x0 - dummy sync flag']
  #allocation26 [shape = 's32[]', space=sflag, size = 0x4, offset = 0, fixed_abs, tag = 'sflag constant byte address 0x0 - dummy sync flag']
  #allocation27 [shape = 's32[]', space=sflag, size = 0x4, offset = 0, fixed_abs, tag = 'sflag constant byte address 0x0 - dummy sync flag']
  #allocation28 [shape = 's32[]', space=sflag, size = 0x4, offset = 0, fixed_abs, tag = 'sflag constant byte address 0x0 - dummy sync flag']
  #allocation29 [shape = 's32[]', space=sflag, size = 0x4, offset = 0, fixed_abs, tag = 'sflag constant byte address 0x0 - dummy sync flag']
  #allocation30 [shape = 's32[]', space=sflag, size = 0x4, offset = 0, fixed_abs, tag = 'sflag constant byte address 0x0 - dummy sync flag']
  #allocation31 [shape = 's32[]', space=sflag, size = 0x4, offset = 0, fixed_abs, tag = 'sflag constant byte address 0x0 - dummy sync flag']
  #allocation32 [shape = 's32[]', space=sflag, size = 0x4, offset = 0, fixed_abs, tag = 'sflag constant byte address 0x0 - dummy sync flag']
  #allocation33 [shape = 's32[]', space=sflag, size = 0x4, offset = 0, fixed_abs, tag = 'sflag constant byte address 0x0 - dummy sync flag']
  #allocation34 [shape = 's32[]', space=sflag, size = 0x4, offset = 0, fixed_abs, tag = 'sflag constant byte address 0x0 - dummy sync flag']
  #allocation35 [shape = 's32[]', space=sflag, size = 0x4, offset = 0, fixed_abs, tag = 'sflag constant byte address 0x0 - dummy sync flag']
  #allocation36 [shape = 's32[]', space=sflag, size = 0x4, offset = 0, fixed_abs, tag = 'sflag constant byte address 0x0 - dummy sync flag']
  #allocation37 [shape = 's32[]', space=sflag, size = 0x4, offset = 0, fixed_abs, tag = 'sflag constant byte address 0x0 - dummy sync flag']
  #allocation38 [shape = 's32[]', space=sflag, size = 0x4, offset = 0, fixed_abs, tag = 'sflag constant byte address 0x0 - dummy sync flag']
  #allocation39 [shape = 's32[]', space=sflag, size = 0x4, offset = 0, fixed_abs, tag = 'sflag constant byte address 0x0 - dummy sync flag']
  #allocation40 [shape = 's32[]', space=sflag, size = 0x4, offset = 0, fixed_abs, tag = 'sflag constant byte address 0x0 - dummy sync flag']
  #allocation41 [shape = 's32[]', space=sflag, size = 0x4, offset = 0, fixed_abs, tag = 'sflag constant byte address 0x0 - dummy sync flag']
  %s0 = inlined_call_operand.hbm [shape: s32[16], index: 0, kind: input, shape index: {}]
  %s1 = inlined_call_operand.hbm [shape: f32[512,128], index: 1, kind: input, shape index: {}]
  %s2 = inlined_call_operand.hbm [shape: f32[16,128], index: 2, kind: output, shape index: {}]
  %s3 = sld [smem:[#allocation0]]
  $region74: #{tpu_custom_call.1} parent=0
    _
  %s5 = ssub.s32 1, %s3
  %s6 = scalar_select 0, %s5, %s3
  %8 = dma.hbm_to_smem %s0, 16, [#allocation5], [#allocation4]
  %9 = dma.done [#allocation4], 16
  %10 = sfence
  $region1: #{tpu_custom_call.1} parent=0
    #allocation6 [shape = 'u8[8192]{0}', space=vmem, size = 0x2000, scoped, tag = 'output window, operand 0, single buffered']
    #allocation7 [shape = 's32[1]{0}', space=sflag, size = 0x4, scoped, tag = 'scoped memory for tpu_custom_call.1']
    %11 = vsyncpa [#allocation7], 0
    %s12 = smul.u32 0, 16
    %s13 = sld [smem:[#allocation5 + %s12]]
    %s14 = smul.addr %s13, 16
    %s15 = scalar_lea.hbm %s1, %s14
    // Predicated region
    $region2: #{tpu_custom_call.1} parent=1 // pred_check
      _
    $region3: #{tpu_custom_call.1} parent=1 // pred_check_branch
      %17 = sbr.rel target = $region5
    $region4: #{tpu_custom_call.1} parent=1 // pred_region
      %18 = sst [smem:[#allocation10]] [#allocation9]
      %19 = sst [smem:[#allocation11]] [#allocation8]
    $region5: #{tpu_custom_call.1} parent=1 // pred_fallthru
      _
    %21 = shalt.err (0)
    %s23 = sshll.u32 [#allocation2], 4
    %s24 = int_to_ptr.vmem [resolvable:$true] %s23
    %26 = dma.hbm_to_vmem [thread:$0]  %s15, 16, %s24, [#allocation3]
    %s27 = sadd.s32 %s12, 1
    %s28 = sld [smem:[#allocation5 + %s27]]
    %s29 = smul.addr %s28, 16
    %s30 = scalar_lea.hbm %s1, %s29
    %s31 = scalar_lea.vmem [#allocation2], 1
    // Predicated region
    $region6: #{tpu_custom_call.1} parent=1 // pred_check
      _
    $region7: #{tpu_custom_call.1} parent=1 // pred_check_branch
      %33 = sbr.rel target = $region9
    $region8: #{tpu_custom_call.1} parent=1 // pred_region
      %34 = sst [smem:[#allocation10]] [#allocation13]
      %35 = sst [smem:[#allocation11]] [#allocation12]
    $region9: #{tpu_custom_call.1} parent=1 // pred_fallthru
      _
    %37 = shalt.err (0)
    %s39 = sshll.u32 %s31, 4
    %s40 = int_to_ptr.vmem [resolvable:$true] %s39
    %42 = dma.hbm_to_vmem [thread:$0]  %s30, 16, %s40, [#allocation3]
    %s43 = sadd.s32 %s12, 2
    %s44 = sld [smem:[#allocation5 + %s43]]
    %s45 = smul.addr %s44, 16
    %s46 = scalar_lea.hbm %s1, %s45
    %s47 = scalar_lea.vmem [#allocation2], 2
    // Predicated region
    $region10: #{tpu_custom_call.1} parent=1 // pred_check
      _
    $region11: #{tpu_custom_call.1} parent=1 // pred_check_branch
      %49 = sbr.rel target = $region13
    $region12: #{tpu_custom_call.1} parent=1 // pred_region
      %50 = sst [smem:[#allocation10]] [#allocation15]
      %51 = sst [smem:[#allocation11]] [#allocation14]
    $region13: #{tpu_custom_call.1} parent=1 // pred_fallthru
      _
    %53 = shalt.err (0)
    %s55 = sshll.u32 %s47, 4
    %s56 = int_to_ptr.vmem [resolvable:$true] %s55
    %58 = dma.hbm_to_vmem [thread:$0]  %s46, 16, %s56, [#allocation3]
    %s59 = sadd.s32 %s12, 3
    %s60 = sld [smem:[#allocation5 + %s59]]
    %s61 = smul.addr %s60, 16
    %s62 = scalar_lea.hbm %s1, %s61
    %s63 = scalar_lea.vmem [#allocation2], 3
    // Predicated region
    $region14: #{tpu_custom_call.1} parent=1 // pred_check
      _
    $region15: #{tpu_custom_call.1} parent=1 // pred_check_branch
      %65 = sbr.rel target = $region17
    $region16: #{tpu_custom_call.1} parent=1 // pred_region
      %66 = sst [smem:[#allocation10]] [#allocation17]
      %67 = sst [smem:[#allocation11]] [#allocation16]
    $region17: #{tpu_custom_call.1} parent=1 // pred_fallthru
      _
    %69 = shalt.err (0)
    %s71 = sshll.u32 %s63, 4
    %s72 = int_to_ptr.vmem [resolvable:$true] %s71
    %74 = dma.hbm_to_vmem [thread:$0]  %s62, 16, %s72, [#allocation3]
    %s75 = sadd.s32 %s12, 4
    %s76 = sld [smem:[#allocation5 + %s75]]
    %s77 = smul.addr %s76, 16
    %s78 = scalar_lea.hbm %s1, %s77
    %s79 = scalar_lea.vmem [#allocation2], 4
    // Predicated region
    $region18: #{tpu_custom_call.1} parent=1 // pred_check
      _
    $region19: #{tpu_custom_call.1} parent=1 // pred_check_branch
      %81 = sbr.rel target = $region21
    $region20: #{tpu_custom_call.1} parent=1 // pred_region
      %82 = sst [smem:[#allocation10]] [#allocation19]
      %83 = sst [smem:[#allocation11]] [#allocation18]
    $region21: #{tpu_custom_call.1} parent=1 // pred_fallthru
      _
    %85 = shalt.err (0)
    %s87 = sshll.u32 %s79, 4
    %s88 = int_to_ptr.vmem [resolvable:$true] %s87
    %90 = dma.hbm_to_vmem [thread:$0]  %s78, 16, %s88, [#allocation3]
    %s91 = sadd.s32 %s12, 5
    %s92 = sld [smem:[#allocation5 + %s91]]
    %s93 = smul.addr %s92, 16
    %s94 = scalar_lea.hbm %s1, %s93
    %s95 = scalar_lea.vmem [#allocation2], 5
    // Predicated region
    $region22: #{tpu_custom_call.1} parent=1 // pred_check
      _
    $region23: #{tpu_custom_call.1} parent=1 // pred_check_branch
      %97 = sbr.rel target = $region25
    $region24: #{tpu_custom_call.1} parent=1 // pred_region
      %98 = sst [smem:[#allocation10]] [#allocation21]
      %99 = sst [smem:[#allocation11]] [#allocation20]
    $region25: #{tpu_custom_call.1} parent=1 // pred_fallthru
      _
    %101 = shalt.err (0)
    %s103 = sshll.u32 %s95, 4
    %s104 = int_to_ptr.vmem [resolvable:$true] %s103
    %106 = dma.hbm_to_vmem [thread:$0]  %s94, 16, %s104, [#allocation3]
    %s107 = sadd.s32 %s12, 6
    %s108 = sld [smem:[#allocation5 + %s107]]
    %s109 = smul.addr %s108, 16
    %s110 = scalar_lea.hbm %s1, %s109
    %s111 = scalar_lea.vmem [#allocation2], 6
    // Predicated region
    $region26: #{tpu_custom_call.1} parent=1 // pred_check
      _
    $region27: #{tpu_custom_call.1} parent=1 // pred_check_branch
      %113 = sbr.rel target = $region29
    $region28: #{tpu_custom_call.1} parent=1 // pred_region
      %114 = sst [smem:[#allocation10]] [#allocation23]
      %115 = sst [smem:[#allocation11]] [#allocation22]
    $region29: #{tpu_custom_call.1} parent=1 // pred_fallthru
      _
    %117 = shalt.err (0)
    %s119 = sshll.u32 %s111, 4
    %s120 = int_to_ptr.vmem [resolvable:$true] %s119
    %122 = dma.hbm_to_vmem [thread:$0]  %s110, 16, %s120, [#allocation3]
    %s123 = sadd.s32 %s12, 7
    %s124 = sld [smem:[#allocation5 + %s123]]
    %s125 = smul.addr %s124, 16
    %s126 = scalar_lea.hbm %s1, %s125
    %s127 = scalar_lea.vmem [#allocation2], 7
    // Predicated region
    $region30: #{tpu_custom_call.1} parent=1 // pred_check
      _
    $region31: #{tpu_custom_call.1} parent=1 // pred_check_branch
      %129 = sbr.rel target = $region33
    $region32: #{tpu_custom_call.1} parent=1 // pred_region
      %130 = sst [smem:[#allocation10]] [#allocation25]
      %131 = sst [smem:[#allocation11]] [#allocation24]
    $region33: #{tpu_custom_call.1} parent=1 // pred_fallthru
      _
    %133 = shalt.err (0)
    %s135 = sshll.u32 %s127, 4
    %s136 = int_to_ptr.vmem [resolvable:$true] %s135
    %138 = dma.hbm_to_vmem [thread:$0]  %s126, 16, %s136, [#allocation3]
    %s139 = sadd.s32 %s12, 8
    %s140 = sld [smem:[#allocation5 + %s139]]
    %s141 = smul.addr %s140, 16
    %s142 = scalar_lea.hbm %s1, %s141
    %s143 = scalar_lea.vmem [#allocation2], 8
    // Predicated region
    $region34: #{tpu_custom_call.1} parent=1 // pred_check
      _
    $region35: #{tpu_custom_call.1} parent=1 // pred_check_branch
      %145 = sbr.rel target = $region37
    $region36: #{tpu_custom_call.1} parent=1 // pred_region
      %146 = sst [smem:[#allocation10]] [#allocation27]
      %147 = sst [smem:[#allocation11]] [#allocation26]
    $region37: #{tpu_custom_call.1} parent=1 // pred_fallthru
      _
    %149 = shalt.err (0)
    %s151 = sshll.u32 %s143, 4
    %s152 = int_to_ptr.vmem [resolvable:$true] %s151
    %154 = dma.hbm_to_vmem [thread:$0]  %s142, 16, %s152, [#allocation3]
    %s155 = sadd.s32 %s12, 9
    %s156 = sld [smem:[#allocation5 + %s155]]
    %s157 = smul.addr %s156, 16
    %s158 = scalar_lea.hbm %s1, %s157
    %s159 = scalar_lea.vmem [#allocation2], 9
    // Predicated region
    $region38: #{tpu_custom_call.1} parent=1 // pred_check
      _
    $region39: #{tpu_custom_call.1} parent=1 // pred_check_branch
      %161 = sbr.rel target = $region41
    $region40: #{tpu_custom_call.1} parent=1 // pred_region
      %162 = sst [smem:[#allocation10]] [#allocation29]
      %163 = sst [smem:[#allocation11]] [#allocation28]
    $region41: #{tpu_custom_call.1} parent=1 // pred_fallthru
      _
    %165 = shalt.err (0)
    %s167 = sshll.u32 %s159, 4
    %s168 = int_to_ptr.vmem [resolvable:$true] %s167
    %170 = dma.hbm_to_vmem [thread:$0]  %s158, 16, %s168, [#allocation3]
    %s171 = sadd.s32 %s12, 10
    %s172 = sld [smem:[#allocation5 + %s171]]
    %s173 = smul.addr %s172, 16
    %s174 = scalar_lea.hbm %s1, %s173
    %s175 = scalar_lea.vmem [#allocation2], 10
    // Predicated region
    $region42: #{tpu_custom_call.1} parent=1 // pred_check
      _
    $region43: #{tpu_custom_call.1} parent=1 // pred_check_branch
      %177 = sbr.rel target = $region45
    $region44: #{tpu_custom_call.1} parent=1 // pred_region
      %178 = sst [smem:[#allocation10]] [#allocation31]
      %179 = sst [smem:[#allocation11]] [#allocation30]
    $region45: #{tpu_custom_call.1} parent=1 // pred_fallthru
      _
    %181 = shalt.err (0)
    %s183 = sshll.u32 %s175, 4
    %s184 = int_to_ptr.vmem [resolvable:$true] %s183
    %186 = dma.hbm_to_vmem [thread:$0]  %s174, 16, %s184, [#allocation3]
    %s187 = sadd.s32 %s12, 11
    %s188 = sld [smem:[#allocation5 + %s187]]
    %s189 = smul.addr %s188, 16
    %s190 = scalar_lea.hbm %s1, %s189
    %s191 = scalar_lea.vmem [#allocation2], 11
    // Predicated region
    $region46: #{tpu_custom_call.1} parent=1 // pred_check
      _
    $region47: #{tpu_custom_call.1} parent=1 // pred_check_branch
      %193 = sbr.rel target = $region49
    $region48: #{tpu_custom_call.1} parent=1 // pred_region
      %194 = sst [smem:[#allocation10]] [#allocation33]
      %195 = sst [smem:[#allocation11]] [#allocation32]
    $region49: #{tpu_custom_call.1} parent=1 // pred_fallthru
      _
    %197 = shalt.err (0)
    %s199 = sshll.u32 %s191, 4
    %s200 = int_to_ptr.vmem [resolvable:$true] %s199
    %202 = dma.hbm_to_vmem [thread:$0]  %s190, 16, %s200, [#allocation3]
    %s203 = sadd.s32 %s12, 12
    %s204 = sld [smem:[#allocation5 + %s203]]
    %s205 = smul.addr %s204, 16
    %s206 = scalar_lea.hbm %s1, %s205
    %s207 = scalar_lea.vmem [#allocation2], 12
    // Predicated region
    $region50: #{tpu_custom_call.1} parent=1 // pred_check
      _
    $region51: #{tpu_custom_call.1} parent=1 // pred_check_branch
      %209 = sbr.rel target = $region53
    $region52: #{tpu_custom_call.1} parent=1 // pred_region
      %210 = sst [smem:[#allocation10]] [#allocation35]
      %211 = sst [smem:[#allocation11]] [#allocation34]
    $region53: #{tpu_custom_call.1} parent=1 // pred_fallthru
      _
    %213 = shalt.err (0)
    %s215 = sshll.u32 %s207, 4
    %s216 = int_to_ptr.vmem [resolvable:$true] %s215
    %218 = dma.hbm_to_vmem [thread:$0]  %s206, 16, %s216, [#allocation3]
    %s219 = sadd.s32 %s12, 13
    %s220 = sld [smem:[#allocation5 + %s219]]
    %s221 = smul.addr %s220, 16
    %s222 = scalar_lea.hbm %s1, %s221
    %s223 = scalar_lea.vmem [#allocation2], 13
    // Predicated region
    $region54: #{tpu_custom_call.1} parent=1 // pred_check
      _
    $region55: #{tpu_custom_call.1} parent=1 // pred_check_branch
      %225 = sbr.rel target = $region57
    $region56: #{tpu_custom_call.1} parent=1 // pred_region
      %226 = sst [smem:[#allocation10]] [#allocation37]
      %227 = sst [smem:[#allocation11]] [#allocation36]
    $region57: #{tpu_custom_call.1} parent=1 // pred_fallthru
      _
    %229 = shalt.err (0)
    %s231 = sshll.u32 %s223, 4
    %s232 = int_to_ptr.vmem [resolvable:$true] %s231
    %234 = dma.hbm_to_vmem [thread:$0]  %s222, 16, %s232, [#allocation3]
    %s235 = sadd.s32 %s12, 14
    %s236 = sld [smem:[#allocation5 + %s235]]
    %s237 = smul.addr %s236, 16
    %s238 = scalar_lea.hbm %s1, %s237
    %s239 = scalar_lea.vmem [#allocation2], 14
    // Predicated region
    $region58: #{tpu_custom_call.1} parent=1 // pred_check
      _
    $region59: #{tpu_custom_call.1} parent=1 // pred_check_branch
      %241 = sbr.rel target = $region61
    $region60: #{tpu_custom_call.1} parent=1 // pred_region
      %242 = sst [smem:[#allocation10]] [#allocation39]
      %243 = sst [smem:[#allocation11]] [#allocation38]
    $region61: #{tpu_custom_call.1} parent=1 // pred_fallthru
      _
    %245 = shalt.err (0)
    %s247 = sshll.u32 %s239, 4
    %s248 = int_to_ptr.vmem [resolvable:$true] %s247
    %250 = dma.hbm_to_vmem [thread:$0]  %s238, 16, %s248, [#allocation3]
    %s251 = sadd.s32 %s12, 15
    %s252 = sld [smem:[#allocation5 + %s251]]
    %s253 = smul.addr %s252, 16
    %s254 = scalar_lea.hbm %s1, %s253
    %s255 = scalar_lea.vmem [#allocation2], 15
    // Predicated region
    $region62: #{tpu_custom_call.1} parent=1 // pred_check
      _
    $region63: #{tpu_custom_call.1} parent=1 // pred_check_branch
      %257 = sbr.rel target = $region65
    $region64: #{tpu_custom_call.1} parent=1 // pred_region
      %258 = sst [smem:[#allocation10]] [#allocation41]
      %259 = sst [smem:[#allocation11]] [#allocation40]
    $region65: #{tpu_custom_call.1} parent=1 // pred_fallthru
      _
    %261 = shalt.err (0)
    %s263 = sshll.u32 %s255, 4
    %s264 = int_to_ptr.vmem [resolvable:$true] %s263
    %266 = dma.hbm_to_vmem [thread:$0]  %s254, 16, %s264, [#allocation3]
    %s267 = smul.u32 1, 1
    %s268 = sshll.u32 %s267, 4
    %269 = dma.done [#allocation3], %s268
    %s270 = sshll.u32 %s267, 4
    %271 = dma.done [#allocation3], %s270
    %s272 = sshll.u32 %s267, 4
    %273 = dma.done [#allocation3], %s272
    %s274 = sshll.u32 %s267, 4
    %275 = dma.done [#allocation3], %s274
    %s276 = sshll.u32 %s267, 4
    %277 = dma.done [#allocation3], %s276
    %s278 = sshll.u32 %s267, 4
    %279 = dma.done [#allocation3], %s278
    %s280 = sshll.u32 %s267, 4
    %281 = dma.done [#allocation3], %s280
    %s282 = sshll.u32 %s267, 4
    %283 = dma.done [#allocation3], %s282
    %s284 = sshll.u32 %s267, 4
    %285 = dma.done [#allocation3], %s284
    %s286 = sshll.u32 %s267, 4
    %287 = dma.done [#allocation3], %s286
    %s288 = sshll.u32 %s267, 4
    %289 = dma.done [#allocation3], %s288
    %s290 = sshll.u32 %s267, 4
    %291 = dma.done [#allocation3], %s290
    %s292 = sshll.u32 %s267, 4
    %293 = dma.done [#allocation3], %s292
    %s294 = sshll.u32 %s267, 4
    %295 = dma.done [#allocation3], %s294
    %s296 = sshll.u32 %s267, 4
    %297 = dma.done [#allocation3], %s296
    %s298 = sshll.u32 %s267, 4
    %299 = dma.done [#allocation3], %s298
    %v300 = vld [vmem:[#allocation2] sm:$0xff]
    %v301 = vld [vmem:[#allocation2 + $0x8] sm:$0xff]
    %302 = vst [vmem:[#allocation6] sm:$0xff] %v300
    %303 = vst [vmem:[#allocation6 + $0x8] sm:$0xff] %v301
    // Predicated region
    $region66: #{tpu_custom_call.1} parent=1 // pred_check
      _
    $region67: #{tpu_custom_call.1} parent=1 // pred_check_branch
      %305 = sbr.rel (0) target = $region69
    $region68: #{tpu_custom_call.1} parent=1 // pred_region
      %s307 = ssub.s32 256, 256
      %308 = vsyncadd [#allocation7], %s307
      %s309 = sshll.u32 [#allocation6], 4
      %s310 = int_to_ptr.vmem [resolvable:$true] %s309
      %315 = dma.vmem_to_hbm [thread:$0]  %s310, 256, %s2, [#allocation7], 128, 128, 8
    $region69: #{tpu_custom_call.1} parent=1 // pred_fallthru
      _
    // Predicated region
    $region70: #{tpu_custom_call.1} parent=1 // pred_check
      _
    $region71: #{tpu_custom_call.1} parent=1 // pred_check_branch
      %317 = sbr.rel (0) target = $region73
    $region72: #{tpu_custom_call.1} parent=1 // pred_region
      %318 = dma.done [#allocation7], 256
    $region73: #{tpu_custom_call.1} parent=1 // pred_fallthru
      _
    %319 = vsyncpa [#allocation7], 1
  %320 = vsyncmov [#allocation3]
  %s321 = vpop.sfrf %320
  %p322 = scmp.eq.s32.totalorder %s321, 0
  %p323 = pneg %p322
  %325 = shalt.err (%p323)

</llo_original>
